<compile_context>
chip_gen: v7x
topology: tpu7x:2x2x1
jax: 0.10.0
libtpu: 0.0.40
codegen_flags: <defaults>
</compile_context>

<pallas_src>
import jax
import jax.numpy as jnp
from jax.experimental import pallas as pl
from jax.experimental.pallas import tpu as pltpu


LEAKY_SLOPE = 0.1
LANE = 128        # lane width everything is padded to
ROW_ALIGN = 16    # bf16 sublane tile height (row offsets must align to this)


def _ru(n, m):
    return -(-n // m) * m


# ---------------------------------------------------------------------------
# Shared math: runs both inside the kernel (on Refs) and as the tight
# reference (on plain arrays).  `wsrc` / `bsrc` only need 2-D slicing.
# ---------------------------------------------------------------------------
def _forward_math(wsrc, bsrc, x, plan):
    ball = bsrc[...]                                   # tiny bias slab (few vregs)

    def wblk(name):
        r0, nrows, ncols = plan["w"][name]
        return wsrc[r0:r0 + nrows, 0:ncols]            # static, tile-aligned slice

    def bblk(name):
        r, ncols = plan["b"][name]
        return ball[r:r + 1, 0:ncols]

    def lrelu(y):
        # identical to where(y>=0, y, 0.1*y) for slope in (0,1); 2 VALU ops.
        return jnp.maximum(y, LEAKY_SLOPE * y)

    def dense(h, name):
        return jnp.dot(h.astype(jnp.bfloat16), wblk(name),
                       preferred_element_type=jnp.float32) + bblk(name)

    # trunk: input layer (+folded BN) then residual hidden blocks
    h = lrelu(dense(x, "in"))
    for name, resname in plan["hidden"]:
        identity = h if resname is None else dense(h, resname)
        h = lrelu(dense(h, name)) + identity

    # merged attack_hidden1 ++ risk_hidden1, split at a lane-aligned column
    y = lrelu(dense(h, "ar"))
    a, r = y[:, :plan["split"]], y[:, plan["split"]:]

    a = lrelu(dense(a, "a2"))                                   # attack_hidden2
    z = lrelu(dense(jnp.concatenate([a, r], axis=1), "blk"))    # attack3 ++ risk2 (block-diag)
    return dense(z, "head")                                     # both heads -> [B,128] slab


# ---------------------------------------------------------------------------
# One-time parameter fusion: BN folding, tail/head merging, slab packing
# ---------------------------------------------------------------------------
def _fold_bn(w, b, scale, shift):
    # Linear followed by eval-mode BN  ==  Linear with W*scale, b*scale+shift
    return w * scale[None, :], b * scale + shift


def fuse_params(params):
    input_size, h0 = params["input_w"].shape
    hidden_sizes = [h0] + [lay["w"].shape[1] for lay in params["hidden"]]
    na = params["attack_head"][0].shape[1]
    nr = params["risk_head"][0].shape[1]
    assert na + nr <= LANE, "combined head widths must fit one 128-lane slab"

    P_x = _ru(input_size, ROW_ALIGN)
    P_h = [_ru(h, LANE) for h in hidden_sizes]

    entries = []   # (name, padded W f32 [pr,pc], padded b f32 [pc])

    def add(name, w, b, pr, pc):
        wp = jnp.zeros((pr, pc), jnp.float32).at[:w.shape[0], :w.shape[1]].set(w)
        bp = jnp.zeros((pc,), jnp.float32).at[:b.shape[0]].set(b)
        entries.append((name, wp, bp))

    # input layer + bn_input (folded)
    w, b = _fold_bn(params["input_w"], params["input_b"], *params["bn_input"])
    add("in", w, b, P_x, P_h[0])

    # residual hidden blocks
    hidden_plan = []
    for i, lay in enumerate(params["hidden"]):
        w, b = _fold_bn(lay["w"], lay["b"], lay["s"], lay["t"])
        add(f"h{i}", w, b, P_h[i], P_h[i + 1])
        if lay["res"] is None:
            hidden_plan.append((f"h{i}", None))
        else:
            rw, rb = lay["res"]                     # plain Linear (no BN)
            add(f"r{i}", rw, rb, P_h[i], P_h[i + 1])
            hidden_plan.append((f"h{i}", f"r{i}"))

    # merged attack_hidden1 ++ risk_hidden1 (both consume the shared trunk)
    wa1, ba1 = _fold_bn(*params["attack1"])
    wr1, br1 = _fold_bn(*params["risk1"])
    split = wa1.shape[1]                            # 256
    assert split % LANE == 0, "attack1 width must be lane aligned for the split"
    add("ar", jnp.concatenate([wa1, wr1], axis=1),
        jnp.concatenate([ba1, br1], axis=0), P_h[-1], split + wr1.shape[1])

    # attack_hidden2
    wa2, ba2 = _fold_bn(*params["attack2"])
    add("a2", wa2, ba2, 256, 128)

    # merged attack_hidden3 ++ risk_hidden2 as one block-diagonal [256,128]
    wa3, ba3 = _fold_bn(*params["attack3"])
    wr2, br2 = _fold_bn(*params["risk2"])
    wblk = jnp.zeros((256, 128), jnp.float32)
    wblk = wblk.at[:128, :64].set(wa3).at[128:, 64:128].set(wr2)
    add("blk", wblk, jnp.concatenate([ba3, br2], axis=0), 256, 128)

    # both heads merged into one lane-dense [128,128] matmul
    wah, bah = params["attack_head"]
    wrh, brh = params["risk_head"]
    whead = jnp.zeros((128, 128), jnp.float32)
    whead = whead.at[:64, :na].set(wah).at[64:128, na:na + nr].set(wrh)
    bhead = jnp.zeros((128,), jnp.float32).at[:na].set(bah).at[na:na + nr].set(brh)
    add("head", whead, bhead, 128, 128)

    # pack into one bf16 weight slab + one f32 bias slab
    LW = max(wp.shape[1] for _, wp, _ in entries)
    total_rows = sum(wp.shape[0] for _, wp, _ in entries)
    w_slab = jnp.zeros((total_rows, LW), jnp.float32)
    b_slab = jnp.zeros((_ru(len(entries), 8), LW), jnp.float32)

    w_layout, b_layout = {}, {}
    row = 0
    for i, (name, wp, bp) in enumerate(entries):
        assert row % ROW_ALIGN == 0
        w_slab = w_slab.at[row:row + wp.shape[0], :wp.shape[1]].set(wp)
        w_layout[name] = (row, wp.shape[0], wp.shape[1])
        row += wp.shape[0]
        b_slab = b_slab.at[i, :bp.shape[0]].set(bp)
        b_layout[name] = (i, bp.shape[0])

    w_slab = w_slab.astype(jnp.bfloat16)            # MXU-native operand dtype

    plan = {"w": w_layout, "b": b_layout, "hidden": tuple(hidden_plan),
            "split": split, "na": na, "nr": nr,
            "x_pad": P_x, "out_lanes": LANE}
    return w_slab, b_slab, plan


# ---------------------------------------------------------------------------
# Forward pass: exactly one pallas_call, three input DMAs (x + two slabs)
# ---------------------------------------------------------------------------
def enhanced_dual_nn_forward(fused, x):
    w_slab, b_slab, plan = fused
    B = x.shape[0]
    if x.shape[1] != plan["x_pad"]:
        x = jnp.pad(x, ((0, 0), (0, plan["x_pad"] - x.shape[1])))

    def kernel(x_ref, w_ref, b_ref, o_ref):
        o_ref[...] = _forward_math(w_ref, b_ref, x_ref[...], plan)

    flops = 2 * B * sum(nrows * ncols for (_, nrows, ncols) in plan["w"].values())
    bytes_accessed = (x.size * 4 + int(w_slab.size) * 2 + int(b_slab.size) * 4
                      + B * plan["out_lanes"] * 4)

    vmem = pl.BlockSpec(memory_space=pltpu.MemorySpace.VMEM)
    # TODO(synk): for production batches add a leading batch grid axis (tile
    #   256-1024 rows) with dimension_semantics=("parallel",) so v7x's two
    #   TensorCores split rows; weight BlockSpecs would return block 0 so the
    #   slabs stay VMEM-resident across grid steps.  Gridless here (batch=8).
    out = pl.pallas_call(
        kernel,
        out_shape=jax.ShapeDtypeStruct((B, plan["out_lanes"]), jnp.float32),
        in_specs=[vmem, vmem, vmem],
        out_specs=vmem,
        cost_estimate=pl.CostEstimate(flops=flops, transcendentals=0,
                                      bytes_accessed=bytes_accessed),
    )(x, w_slab, b_slab)

    na, nr = plan["na"], plan["nr"]
    return out[:, :na], out[:, na:na + nr]


# ---------------------------------------------------------------------------
# Deterministic parameter construction (reference / unfused layout)
# ---------------------------------------------------------------------------
def _linear_params(key, fan_in, fan_out):
    kw, kb = jax.random.split(key)
    bound = 1.0 / jnp.sqrt(jnp.float32(fan_in))
    w = jax.random.uniform(kw, (fan_in, fan_out), jnp.float32, -bound, bound)
    b = jax.random.uniform(kb, (fan_out,), jnp.float32, -bound, bound)
    return w, b


def _bn_params(key, n, eps=1e-5):
    k1, k2, k3, k4 = jax.random.split(key, 4)
    gamma = 1.0 + 0.1 * jax.random.normal(k1, (n,), jnp.float32)
    beta = 0.1 * jax.random.normal(k2, (n,), jnp.float32)
    running_mean = 0.1 * jax.random.normal(k3, (n,), jnp.float32)
    running_var = 1.0 + 0.1 * jax.random.uniform(k4, (n,), jnp.float32)
    scale = gamma / jnp.sqrt(running_var + eps)
    shift = beta - running_mean * scale
    return scale, shift


def init_params(key, input_size, hidden_sizes, num_classes_attack, num_classes_risk):
    keys = iter(jax.random.split(key, 64))
    p = {}
    p["input_w"], p["input_b"] = _linear_params(next(keys), input_size, hidden_sizes[0])
    p["bn_input"] = _bn_params(next(keys), hidden_sizes[0])

    p["hidden"] = []
    for i in range(len(hidden_sizes) - 1):
        w, b = _linear_params(next(keys), hidden_sizes[i], hidden_sizes[i + 1])
        s, t = _bn_params(next(keys), hidden_sizes[i + 1])
        if hidden_sizes[i] == hidden_sizes[i + 1]:
            res = None
        else:
            res = _linear_params(next(keys), hidden_sizes[i], hidden_sizes[i + 1])
        p["hidden"].append({"w": w, "b": b, "s": s, "t": t, "res": res})

    last = hidden_sizes[-1]
    p["attack1"] = _linear_params(next(keys), last, 256) + _bn_params(next(keys), 256)
    p["attack2"] = _linear_params(next(keys), 256, 128) + _bn_params(next(keys), 128)
    p["attack3"] = _linear_params(next(keys), 128, 64) + _bn_params(next(keys), 64)
    p["attack_head"] = _linear_params(next(keys), 64, num_classes_attack)

    p["risk1"] = _linear_params(next(keys), last, 128) + _bn_params(next(keys), 128)
    p["risk2"] = _linear_params(next(keys), 128, 64) + _bn_params(next(keys), 64)
    p["risk_head"] = _linear_params(next(keys), 64, num_classes_risk)
    return p


# ---------------------------------------------------------------------------
# Pure-JAX full-precision reference (unfused params) for sanity checking
# ---------------------------------------------------------------------------
def _ref_forward(params, x):
    lrelu = lambda y: jnp.where(y >= 0, y, 0.1 * y)
    s, t = params["bn_input"]
    h = lrelu((x @ params["input_w"] + params["input_b"]) * s + t)
    for layer in params["hidden"]:
        identity = h if layer["res"] is None else h @ layer["res"][0] + layer["res"][1]
        h = lrelu((h @ layer["w"] + layer["b"]) * layer["s"] + layer["t"]) + identity
    a = h
    for key in ("attack1", "attack2", "attack3"):
        w, b, s, t = params[key]
        a = lrelu((a @ w + b) * s + t)
    attack_out = a @ params["attack_head"][0] + params["attack_head"][1]
    r = h
    for key in ("risk1", "risk2"):
        w, b, s, t = params[key]
        r = lrelu((r @ w + b) * s + t)
    risk_out = r @ params["risk_head"][0] + params["risk_head"][1]
    return attack_out, risk_out


# ---------------------------------------------------------------------------
if __name__ == "__main__":
    key = jax.random.PRNGKey(0)
    k_param, k_x = jax.random.split(key)

    input_size = 16
    hidden_sizes = [32, 32, 64]       # one identity residual (32==32), one projected (32->64)
    num_classes_attack = 5
    num_classes_risk = 3
    batch = 8

    params = init_params(k_param, input_size, hidden_sizes,
                         num_classes_attack, num_classes_risk)
    x = jax.random.normal(k_x, (batch, input_size), jnp.float32)

    fused = fuse_params(params)                         # BN fold + merge + slab pack
    attack_out, risk_out = enhanced_dual_nn_forward(fused, x)
    attack_out = jax.block_until_ready(attack_out)
    risk_out = jax.block_until_ready(risk_out)

    assert attack_out.shape == (batch, num_classes_attack)
    assert risk_out.shape == (batch, num_classes_risk)

    # Tight check: identical fused/bf16 numerics evaluated with plain JAX ops.
    w_slab, b_slab, plan = fused
    x_pad = x if x.shape[1] == plan["x_pad"] else jnp.pad(
        x, ((0, 0), (0, plan["x_pad"] - x.shape[1])))
    ref_slab = _forward_math(w_slab, b_slab, x_pad, plan)
    na, nr = plan["na"], plan["nr"]
    assert jnp.allclose(attack_out, ref_slab[:, :na], atol=1e-3, rtol=1e-3)
    assert jnp.allclose(risk_out, ref_slab[:, na:na + nr], atol=1e-3, rtol=1e-3)

    # Loose check vs. full-precision unfused reference (bf16 operand roundoff).
    ref_a, ref_r = _ref_forward(params, x)
    assert jnp.allclose(attack_out, ref_a, atol=5e-2, rtol=5e-2)
    assert jnp.allclose(risk_out, ref_r, atol=5e-2, rtol=5e-2)

    print("KERNEL_OK")
</pallas_src>

<mosaic_0001>
module attributes {stable_mosaic.version = 11 : i64} {
  func.func @kernel(%arg0: memref<8x16xf32, #tpu.memory_space<vmem>>, %arg1: memref<1168x384xbf16, #tpu.memory_space<vmem>>, %arg2: memref<8x384xf32, #tpu.memory_space<vmem>>, %arg3: memref<8x128xf32, #tpu.memory_space<vmem>>) attributes {dimension_semantics = [], scalar_prefetch = 0 : i64, scratch_operands = 0 : i64, tpu.core_type = #tpu.core_type<tc>} {
    %c0 = arith.constant 0 : index
    %c0_0 = arith.constant 0 : index
    %0 = vector.load %arg0[%c0, %c0_0] : memref<8x16xf32, #tpu.memory_space<vmem>>, vector<8x16xf32>
    %c0_1 = arith.constant 0 : index
    %c0_2 = arith.constant 0 : index
    %1 = vector.load %arg2[%c0_1, %c0_2] : memref<8x384xf32, #tpu.memory_space<vmem>>, vector<8x384xf32>
    %2 = arith.truncf %0 : vector<8x16xf32> to vector<8x16xbf16>
    %c0_3 = arith.constant 0 : index
    %c0_4 = arith.constant 0 : index
    %3 = vector.load %arg1[%c0_3, %c0_4] : memref<1168x384xbf16, #tpu.memory_space<vmem>>, vector<16x128xbf16>
    %cst = arith.constant dense<0.000000e+00> : vector<8x128xf32>
    %4 = tpu.matmul %2, %3, %cst {dimension_numbers = #tpu.dot_dimension_numbers<[1], [0], [0], [1], [0, 0, 1, 1], [], []>} : vector<8x16xbf16>, vector<16x128xbf16>, vector<8x128xf32> -> vector<8x128xf32>
    %5 = vector.extract_strided_slice %1 {offsets = [0, 0], sizes = [1, 128], strides = [1, 1]} : vector<8x384xf32> to vector<1x128xf32>
    %6 = vector.broadcast %5 : vector<1x128xf32> to vector<8x128xf32>
    %7 = arith.addf %4, %6 : vector<8x128xf32>
    %cst_5 = arith.constant 1.000000e-01 : f32
    %8 = vector.broadcast %cst_5 : f32 to vector<8x128xf32>
    %9 = arith.mulf %8, %7 : vector<8x128xf32>
    %10 = arith.maximumf %7, %9 : vector<8x128xf32>
    %11 = arith.truncf %10 : vector<8x128xf32> to vector<8x128xbf16>
    %c16 = arith.constant 16 : index
    %c0_6 = arith.constant 0 : index
    %12 = vector.load %arg1[%c16, %c0_6] : memref<1168x384xbf16, #tpu.memory_space<vmem>>, vector<128x128xbf16>
    %cst_7 = arith.constant dense<0.000000e+00> : vector<8x128xf32>
    %13 = tpu.matmul %11, %12, %cst_7 {dimension_numbers = #tpu.dot_dimension_numbers<[1], [0], [0], [1], [0, 0, 1, 1], [], []>} : vector<8x128xbf16>, vector<128x128xbf16>, vector<8x128xf32> -> vector<8x128xf32>
    %14 = vector.extract_strided_slice %1 {offsets = [1, 0], sizes = [1, 128], strides = [1, 1]} : vector<8x384xf32> to vector<1x128xf32>
    %15 = vector.broadcast %14 : vector<1x128xf32> to vector<8x128xf32>
    %16 = arith.addf %13, %15 : vector<8x128xf32>
    %cst_8 = arith.constant 1.000000e-01 : f32
    %17 = vector.broadcast %cst_8 : f32 to vector<8x128xf32>
    %18 = arith.mulf %17, %16 : vector<8x128xf32>
    %19 = arith.maximumf %16, %18 : vector<8x128xf32>
    %20 = arith.addf %19, %10 : vector<8x128xf32>
    %21 = arith.truncf %20 : vector<8x128xf32> to vector<8x128xbf16>
    %c272 = arith.constant 272 : index
    %c0_9 = arith.constant 0 : index
    %22 = vector.load %arg1[%c272, %c0_9] : memref<1168x384xbf16, #tpu.memory_space<vmem>>, vector<128x128xbf16>
    %cst_10 = arith.constant dense<0.000000e+00> : vector<8x128xf32>
    %23 = tpu.matmul %21, %22, %cst_10 {dimension_numbers = #tpu.dot_dimension_numbers<[1], [0], [0], [1], [0, 0, 1, 1], [], []>} : vector<8x128xbf16>, vector<128x128xbf16>, vector<8x128xf32> -> vector<8x128xf32>
    %24 = vector.extract_strided_slice %1 {offsets = [3, 0], sizes = [1, 128], strides = [1, 1]} : vector<8x384xf32> to vector<1x128xf32>
    %25 = vector.broadcast %24 : vector<1x128xf32> to vector<8x128xf32>
    %26 = arith.addf %23, %25 : vector<8x128xf32>
    %27 = arith.truncf %20 : vector<8x128xf32> to vector<8x128xbf16>
    %c144 = arith.constant 144 : index
    %c0_11 = arith.constant 0 : index
    %28 = vector.load %arg1[%c144, %c0_11] : memref<1168x384xbf16, #tpu.memory_space<vmem>>, vector<128x128xbf16>
    %cst_12 = arith.constant dense<0.000000e+00> : vector<8x128xf32>
    %29 = tpu.matmul %27, %28, %cst_12 {dimension_numbers = #tpu.dot_dimension_numbers<[1], [0], [0], [1], [0, 0, 1, 1], [], []>} : vector<8x128xbf16>, vector<128x128xbf16>, vector<8x128xf32> -> vector<8x128xf32>
    %30 = vector.extract_strided_slice %1 {offsets = [2, 0], sizes = [1, 128], strides = [1, 1]} : vector<8x384xf32> to vector<1x128xf32>
    %31 = vector.broadcast %30 : vector<1x128xf32> to vector<8x128xf32>
    %32 = arith.addf %29, %31 : vector<8x128xf32>
    %cst_13 = arith.constant 1.000000e-01 : f32
    %33 = vector.broadcast %cst_13 : f32 to vector<8x128xf32>
    %34 = arith.mulf %33, %32 : vector<8x128xf32>
    %35 = arith.maximumf %32, %34 : vector<8x128xf32>
    %36 = arith.addf %35, %26 : vector<8x128xf32>
    %37 = arith.truncf %36 : vector<8x128xf32> to vector<8x128xbf16>
    %c400 = arith.constant 400 : index
    %c0_14 = arith.constant 0 : index
    %38 = vector.load %arg1[%c400, %c0_14] : memref<1168x384xbf16, #tpu.memory_space<vmem>>, vector<128x384xbf16>
    %cst_15 = arith.constant dense<0.000000e+00> : vector<8x384xf32>
    %39 = tpu.matmul %37, %38, %cst_15 {dimension_numbers = #tpu.dot_dimension_numbers<[1], [0], [0], [1], [0, 0, 1, 1], [], []>} : vector<8x128xbf16>, vector<128x384xbf16>, vector<8x384xf32> -> vector<8x384xf32>
    %40 = vector.extract_strided_slice %1 {offsets = [4, 0], sizes = [1, 384], strides = [1, 1]} : vector<8x384xf32> to vector<1x384xf32>
    %41 = vector.broadcast %40 : vector<1x384xf32> to vector<8x384xf32>
    %42 = arith.addf %39, %41 : vector<8x384xf32>
    %cst_16 = arith.constant 1.000000e-01 : f32
    %43 = vector.broadcast %cst_16 : f32 to vector<8x384xf32>
    %44 = arith.mulf %43, %42 : vector<8x384xf32>
    %45 = arith.maximumf %42, %44 : vector<8x384xf32>
    %46 = vector.extract_strided_slice %45 {offsets = [0, 0], sizes = [8, 256], strides = [1, 1]} : vector<8x384xf32> to vector<8x256xf32>
    %47 = vector.extract_strided_slice %45 {offsets = [0, 256], sizes = [8, 128], strides = [1, 1]} : vector<8x384xf32> to vector<8x128xf32>
    %48 = arith.truncf %46 : vector<8x256xf32> to vector<8x256xbf16>
    %c528 = arith.constant 528 : index
    %c0_17 = arith.constant 0 : index
    %49 = vector.load %arg1[%c528, %c0_17] : memref<1168x384xbf16, #tpu.memory_space<vmem>>, vector<256x128xbf16>
    %cst_18 = arith.constant dense<0.000000e+00> : vector<8x128xf32>
    %50 = tpu.matmul %48, %49, %cst_18 {dimension_numbers = #tpu.dot_dimension_numbers<[1], [0], [0], [1], [0, 0, 1, 1], [], []>} : vector<8x256xbf16>, vector<256x128xbf16>, vector<8x128xf32> -> vector<8x128xf32>
    %51 = vector.extract_strided_slice %1 {offsets = [5, 0], sizes = [1, 128], strides = [1, 1]} : vector<8x384xf32> to vector<1x128xf32>
    %52 = vector.broadcast %51 : vector<1x128xf32> to vector<8x128xf32>
    %53 = arith.addf %50, %52 : vector<8x128xf32>
    %cst_19 = arith.constant 1.000000e-01 : f32
    %54 = vector.broadcast %cst_19 : f32 to vector<8x128xf32>
    %55 = arith.mulf %54, %53 : vector<8x128xf32>
    %56 = arith.maximumf %53, %55 : vector<8x128xf32>
    %57 = tpu.concatenate %56, %47 in 1 : vector<8x128xf32>, vector<8x128xf32> -> vector<8x256xf32>
    %58 = arith.truncf %57 : vector<8x256xf32> to vector<8x256xbf16>
    %c784 = arith.constant 784 : index
    %c0_20 = arith.constant 0 : index
    %59 = vector.load %arg1[%c784, %c0_20] : memref<1168x384xbf16, #tpu.memory_space<vmem>>, vector<256x128xbf16>
    %cst_21 = arith.constant dense<0.000000e+00> : vector<8x128xf32>
    %60 = tpu.matmul %58, %59, %cst_21 {dimension_numbers = #tpu.dot_dimension_numbers<[1], [0], [0], [1], [0, 0, 1, 1], [], []>} : vector<8x256xbf16>, vector<256x128xbf16>, vector<8x128xf32> -> vector<8x128xf32>
    %61 = vector.extract_strided_slice %1 {offsets = [6, 0], sizes = [1, 128], strides = [1, 1]} : vector<8x384xf32> to vector<1x128xf32>
    %62 = vector.broadcast %61 : vector<1x128xf32> to vector<8x128xf32>
    %63 = arith.addf %60, %62 : vector<8x128xf32>
    %cst_22 = arith.constant 1.000000e-01 : f32
    %64 = vector.broadcast %cst_22 : f32 to vector<8x128xf32>
    %65 = arith.mulf %64, %63 : vector<8x128xf32>
    %66 = arith.maximumf %63, %65 : vector<8x128xf32>
    %67 = arith.truncf %66 : vector<8x128xf32> to vector<8x128xbf16>
    %c1040 = arith.constant 1040 : index
    %c0_23 = arith.constant 0 : index
    %68 = vector.load %arg1[%c1040, %c0_23] : memref<1168x384xbf16, #tpu.memory_space<vmem>>, vector<128x128xbf16>
    %cst_24 = arith.constant dense<0.000000e+00> : vector<8x128xf32>
    %69 = tpu.matmul %67, %68, %cst_24 {dimension_numbers = #tpu.dot_dimension_numbers<[1], [0], [0], [1], [0, 0, 1, 1], [], []>} : vector<8x128xbf16>, vector<128x128xbf16>, vector<8x128xf32> -> vector<8x128xf32>
    %70 = vector.extract_strided_slice %1 {offsets = [7, 0], sizes = [1, 128], strides = [1, 1]} : vector<8x384xf32> to vector<1x128xf32>
    %71 = vector.broadcast %70 : vector<1x128xf32> to vector<8x128xf32>
    %72 = arith.addf %69, %71 : vector<8x128xf32>
    %c0_25 = arith.constant 0 : index
    %c0_26 = arith.constant 0 : index
    %73 = vector.load %arg3[%c0_25, %c0_26] : memref<8x128xf32, #tpu.memory_space<vmem>>, vector<8x128xf32>
    tpu.vector_store %arg3[%c0_25, %c0_26], %72 {strides = array<i32>} : memref<8x128xf32, #tpu.memory_space<vmem>>, vector<8x128xf32>,
    return
  }
}

</mosaic_0001>

<llo_original>
// kernel: tpu_custom_call.1
$region0: #{tpu_custom_call.1}
  #allocation0 [shape = 'u32[]', space=smem, size = 0x4, offset = 0x4, fixed_abs, tag = 'smem constant byte address 0x4 - core index']
  #allocation1 [shape = 'u32[144,128]{1,0:T(1,128)}', space=vmem, size = 0x12000, scoped, tag = 'internal scratch']
  %s0 = inlined_call_operand.hbm [shape: f32[8,16], index: 0, kind: input, shape index: {}]
  %s1 = inlined_call_operand.hbm [shape: bf16[1168,384], index: 1, kind: input, shape index: {}]
  %s2 = inlined_call_operand.hbm [shape: f32[8,384], index: 2, kind: input, shape index: {}]
  %s3 = inlined_call_operand.hbm [shape: f32[8,128], index: 3, kind: output, shape index: {}]
  %s4 = sld [smem:[#allocation0]]
  $region34: #{tpu_custom_call.1} parent=0
    _
  %s6 = ssub.s32 1, %s4
  %s7 = scalar_select 0, %s6, %s4
  $region1: #{tpu_custom_call.1} parent=0
    #allocation2 [shape = 'u8[4096]{0}', space=vmem, size = 0x1000, scoped, tag = 'input window, operand 0, single buffered']
    #allocation3 [shape = 's32[1]{0}', space=sflag, size = 0x4, scoped, tag = 'scoped memory for tpu_custom_call.1']
    #allocation4 [shape = 's32[1]{0}', space=sflag, size = 0x4, scoped, tag = 'scoped memory for tpu_custom_call.1']
    #allocation5 [shape = 'u8[897024]{0}', space=vmem, size = 0xdb000, scoped, tag = 'input window, operand 1, single buffered']
    #allocation6 [shape = 's32[1]{0}', space=sflag, size = 0x4, scoped, tag = 'scoped memory for tpu_custom_call.1']
    #allocation7 [shape = 'u8[12288]{0}', space=vmem, size = 0x3000, scoped, tag = 'input window, operand 2, single buffered']
    #allocation8 [shape = 'u8[4096]{0}', space=vmem, size = 0x1000, scoped, tag = 'output window, operand 0, single buffered']
    %8 = vsyncpa [#allocation3], 0
    %9 = vsyncpa [#allocation6], 0
    %10 = vsyncpa [#allocation4], 0
    // Predicated region
    $region2: #{tpu_custom_call.1} parent=1 // pred_check
      _
    $region3: #{tpu_custom_call.1} parent=1 // pred_check_branch
      %12 = sbr.rel (0) target = $region5
    $region4: #{tpu_custom_call.1} parent=1 // pred_region
      %s14 = ssub.s32 128, 128
      %15 = vsyncadd [#allocation3], %s14
      %s17 = sshll.u32 [#allocation2], 4
      %s18 = int_to_ptr.vmem [resolvable:$true] %s17
      %20 = dma.hbm_to_vmem [thread:$0]  %s0, 128, %s18, [#allocation3]
    $region5: #{tpu_custom_call.1} parent=1 // pred_fallthru
      _
    // Predicated region
    $region6: #{tpu_custom_call.1} parent=1 // pred_check
      _
    $region7: #{tpu_custom_call.1} parent=1 // pred_check_branch
      %22 = sbr.rel (0) target = $region9
    $region8: #{tpu_custom_call.1} parent=1 // pred_region
      %s24 = ssub.s32 28032, 28032
      %25 = vsyncadd [#allocation6], %s24
      %s26 = sshll.u32 [#allocation5], 4
      %s27 = int_to_ptr.vmem [resolvable:$true] %s26
      %32 = dma.hbm_to_vmem [thread:$0]  %s1, 28032, %s27, [#allocation6], 192, 192, 12
    $region9: #{tpu_custom_call.1} parent=1 // pred_fallthru
      _
    // Predicated region
    $region10: #{tpu_custom_call.1} parent=1 // pred_check
      _
    $region11: #{tpu_custom_call.1} parent=1 // pred_check_branch
      %34 = sbr.rel (0) target = $region13
    $region12: #{tpu_custom_call.1} parent=1 // pred_region
      %s36 = ssub.s32 384, 384
      %37 = vsyncadd [#allocation6], %s36
      %s39 = sshll.u32 [#allocation7], 4
      %s40 = int_to_ptr.vmem [resolvable:$true] %s39
      %42 = dma.hbm_to_vmem [thread:$0]  %s2, 384, %s40, [#allocation6]
    $region13: #{tpu_custom_call.1} parent=1 // pred_fallthru
      _
    // Predicated region
    $region14: #{tpu_custom_call.1} parent=1 // pred_check
      _
    $region15: #{tpu_custom_call.1} parent=1 // pred_check_branch
      %44 = sbr.rel (0) target = $region17
    $region16: #{tpu_custom_call.1} parent=1 // pred_region
      %45 = dma.done [#allocation3], 128
    $region17: #{tpu_custom_call.1} parent=1 // pred_fallthru
      _
    // Predicated region
    $region18: #{tpu_custom_call.1} parent=1 // pred_check
      _
    $region19: #{tpu_custom_call.1} parent=1 // pred_check_branch
      %47 = sbr.rel (0) target = $region21
    $region20: #{tpu_custom_call.1} parent=1 // pred_region
      %48 = dma.done [#allocation6], 28032
    $region21: #{tpu_custom_call.1} parent=1 // pred_fallthru
      _
    // Predicated region
    $region22: #{tpu_custom_call.1} parent=1 // pred_check
      _
    $region23: #{tpu_custom_call.1} parent=1 // pred_check_branch
      %50 = sbr.rel (0) target = $region25
    $region24: #{tpu_custom_call.1} parent=1 // pred_region
      %51 = dma.done [#allocation6], 384
    $region25: #{tpu_custom_call.1} parent=1 // pred_fallthru
      _
    %v53 = vld [vmem:[#allocation2] sm:$0xff]
    %v54 = vld [vmem:[#allocation7] sm:$0xff]
    %v55 = vld [vmem:[#allocation7 + $0x8] sm:$0xff]
    %v56 = vld [vmem:[#allocation7 + $0x10] sm:$0xff]
    %v57 = vpack.c.bf16 %v53, %v53
    %v58 = vld [vmem:[#allocation5] sm:$0xf]
    %v59 = vld [vmem:[#allocation5 + $0xc] sm:$0xf]
    %v60 = vlaneseq
    %v61 = vshrl.u32 %v60, 7
    %v62 = vsub.s32 0, %v61
    %v63 = vrot.slane %v54, %v62
    %v66 = vunpack.c.l.b16 %v58
    %v67 = vunpack.c.l.b16 %v59
    %v68 = vpack.c.b16 %v67, %v66
    %vm70 = vcmask 130048
    %v72 = vsel %vm70, %v57, 0
    %74 = vmatprep.subr.bf16.mxu0 0
    %75 = vmatpush1.bf16.msra.mxu0 %v68
    %76 = vmatprep.subr.bf16.mxu0 0
    %77 = vmatpush1.bf16.msra.mxu0 0
    %78 = vmatprep.subr.bf16.mxu0 0
    %79 = vmatpush1.bf16.msra.mxu0 0
    %80 = vmatprep.subr.bf16.mxu0 0
    %81 = vmatpush1.bf16.msra.mxu0 0
    %82 = vmatprep.subr.bf16.mxu0 0
    %83 = vmatpush1.bf16.msra.mxu0 0
    %84 = vmatprep.subr.bf16.mxu0 0
    %85 = vmatpush1.bf16.msra.mxu0 0
    %86 = vmatprep.subr.bf16.mxu0 0
    %87 = vmatpush1.bf16.msra.mxu0 0
    %88 = vmatprep.subr.bf16.mxu0 0
    %89 = vmatpush1.bf16.msra.mxu0 0
    %90 = vmatprep.subr.bf16.mxu0 0
    %91 = vmatpush1.bf16.msra.mxu0 0
    %92 = vmatprep.subr.bf16.mxu0 0
    %93 = vmatpush1.bf16.msra.mxu0 0
    %94 = vmatprep.subr.bf16.mxu0 0
    %95 = vmatpush1.bf16.msra.mxu0 0
    %96 = vmatprep.subr.bf16.mxu0 0
    %97 = vmatpush1.bf16.msra.mxu0 0
    %98 = vmatprep.subr.bf16.mxu0 0
    %99 = vmatpush1.bf16.msra.mxu0 0
    %100 = vmatprep.subr.bf16.mxu0 0
    %101 = vmatpush1.bf16.msra.mxu0 0
    %102 = vmatprep.subr.bf16.mxu0 0
    %103 = vmatpush1.bf16.msra.mxu0 0
    %104 = vmatprep.subr.bf16.mxu0 0
    %105 = vmatpush1.bf16.msra.mxu0 0
    %106 = vmatprep.mubr.bf16.mxu0 0
    %107 = vmatmul.mubr.bf16.gmra.mrb[0].mxu0 %v72
    %v108 = vpop.f32.mrb[0].mxu0
    %v109 = vadd.f32 %v63, %v108
    %v110 = vpop.f32.mrb[0].mxu0
    %v111 = vpop.f32.mrb[0].mxu0
    %v112 = vpop.f32.mrb[0].mxu0
    %113 = vdwg.mxu0
    %v114 = vmul.f32 %v109, 0.1
    %v115 = vmax.f32 %v109, %v114
    %v116 = vpack.c.bf16 %v115, %v115
    %v117 = vld [vmem:[#allocation5 + $0x18] sm:$0xf]
    %v118 = vld [vmem:[#allocation5 + $0x24] sm:$0xf]
    %v119 = vld [vmem:[#allocation5 + $0x30] sm:$0xf]
    %v120 = vld [vmem:[#allocation5 + $0x3c] sm:$0xf]
    %v121 = vld [vmem:[#allocation5 + $0x48] sm:$0xf]
    %v122 = vld [vmem:[#allocation5 + $0x54] sm:$0xf]
    %v123 = vld [vmem:[#allocation5 + $0x60] sm:$0xf]
    %v124 = vld [vmem:[#allocation5 + $0x6c] sm:$0xf]
    %v125 = vld [vmem:[#allocation5 + $0x78] sm:$0xf]
    %v126 = vld [vmem:[#allocation5 + $0x84] sm:$0xf]
    %v127 = vld [vmem:[#allocation5 + $0x90] sm:$0xf]
    %v128 = vld [vmem:[#allocation5 + $0x9c] sm:$0xf]
    %v129 = vld [vmem:[#allocation5 + $0xa8] sm:$0xf]
    %v130 = vld [vmem:[#allocation5 + $0xb4] sm:$0xf]
    %v131 = vld [vmem:[#allocation5 + $0xc0] sm:$0xf]
    %v132 = vld [vmem:[#allocation5 + $0xcc] sm:$0xf]
    %v133 = vlaneseq
    %v134 = vshrl.u32 %v133, 7
    %v135 = vsub.s32 1, %v134
    %v136 = vrot.slane %v54, %v135
    %v153 = vunpack.c.l.b16 %v117
    %v154 = vunpack.c.l.b16 %v118
    %v155 = vunpack.c.l.b16 %v119
    %v156 = vunpack.c.l.b16 %v120
    %v157 = vunpack.c.l.b16 %v121
    %v158 = vunpack.c.l.b16 %v122
    %v159 = vunpack.c.l.b16 %v123
    %v160 = vunpack.c.l.b16 %v124
    %v161 = vunpack.c.l.b16 %v125
    %v162 = vunpack.c.l.b16 %v126
    %v163 = vunpack.c.l.b16 %v127
    %v164 = vunpack.c.l.b16 %v128
    %v165 = vunpack.c.l.b16 %v129
    %v166 = vunpack.c.l.b16 %v130
    %v167 = vunpack.c.l.b16 %v131
    %v168 = vunpack.c.l.b16 %v132
    %v169 = vpack.c.b16 %v154, %v153
    %v170 = vpack.c.b16 %v156, %v155
    %v171 = vpack.c.b16 %v158, %v157
    %v172 = vpack.c.b16 %v160, %v159
    %v173 = vpack.c.b16 %v162, %v161
    %v174 = vpack.c.b16 %v164, %v163
    %v175 = vpack.c.b16 %v166, %v165
    %v176 = vpack.c.b16 %v168, %v167
    %185 = vmatprep.subr.bf16.mxu0 0
    %186 = vmatpush1.bf16.msra.mxu0 %v169
    %187 = vmatprep.subr.bf16.mxu0 0
    %188 = vmatpush1.bf16.msra.mxu0 %v170
    %189 = vmatprep.subr.bf16.mxu0 0
    %190 = vmatpush1.bf16.msra.mxu0 %v171
    %191 = vmatprep.subr.bf16.mxu0 0
    %192 = vmatpush1.bf16.msra.mxu0 %v172
    %193 = vmatprep.subr.bf16.mxu0 0
    %194 = vmatpush1.bf16.msra.mxu0 %v173
    %195 = vmatprep.subr.bf16.mxu0 0
    %196 = vmatpush1.bf16.msra.mxu0 %v174
    %197 = vmatprep.subr.bf16.mxu0 0
    %198 = vmatpush1.bf16.msra.mxu0 %v175
    %199 = vmatprep.subr.bf16.mxu0 0
    %200 = vmatpush1.bf16.msra.mxu0 %v176
    %201 = vmatprep.subr.bf16.mxu0 0
    %202 = vmatpush1.bf16.msra.mxu0 0
    %203 = vmatprep.subr.bf16.mxu0 0
    %204 = vmatpush1.bf16.msra.mxu0 0
    %205 = vmatprep.subr.bf16.mxu0 0
    %206 = vmatpush1.bf16.msra.mxu0 0
    %207 = vmatprep.subr.bf16.mxu0 0
    %208 = vmatpush1.bf16.msra.mxu0 0
    %209 = vmatprep.subr.bf16.mxu0 0
    %210 = vmatpush1.bf16.msra.mxu0 0
    %211 = vmatprep.subr.bf16.mxu0 0
    %212 = vmatpush1.bf16.msra.mxu0 0
    %213 = vmatprep.subr.bf16.mxu0 0
    %214 = vmatpush1.bf16.msra.mxu0 0
    %215 = vmatprep.subr.bf16.mxu0 0
    %216 = vmatpush1.bf16.msra.mxu0 0
    %217 = vmatprep.mubr.bf16.mxu0 0
    %218 = vmatmul.mubr.bf16.gmra.mrb[0].mxu0 %v116
    %v219 = vpop.f32.mrb[0].mxu0
    %v220 = vadd.f32 %v136, %v219
    %v221 = vpop.f32.mrb[0].mxu0
    %v222 = vpop.f32.mrb[0].mxu0
    %v223 = vpop.f32.mrb[0].mxu0
    %224 = vdwg.mxu0
    %v225 = vmul.f32 %v220, 0.1
    %v226 = vmax.f32 %v220, %v225
    %v227 = vadd.f32 %v226, %v115
    %v228 = vpack.c.bf16 %v227, %v227
    %v229 = vld [vmem:[#allocation5 + $0x198] sm:$0xf]
    %v230 = vld [vmem:[#allocation5 + $0x1a4] sm:$0xf]
    %v231 = vld [vmem:[#allocation5 + $0x1b0] sm:$0xf]
    %v232 = vld [vmem:[#allocation5 + $0x1bc] sm:$0xf]
    %v233 = vld [vmem:[#allocation5 + $0x1c8] sm:$0xf]
    %v234 = vld [vmem:[#allocation5 + $0x1d4] sm:$0xf]
    %v235 = vld [vmem:[#allocation5 + $0x1e0] sm:$0xf]
    %v236 = vld [vmem:[#allocation5 + $0x1ec] sm:$0xf]
    %v237 = vld [vmem:[#allocation5 + $0x1f8] sm:$0xf]
    %v238 = vld [vmem:[#allocation5 + $0x204] sm:$0xf]
    %v239 = vld [vmem:[#allocation5 + $0x210] sm:$0xf]
    %v240 = vld [vmem:[#allocation5 + $0x21c] sm:$0xf]
    %v241 = vld [vmem:[#allocation5 + $0x228] sm:$0xf]
    %v242 = vld [vmem:[#allocation5 + $0x234] sm:$0xf]
    %v243 = vld [vmem:[#allocation5 + $0x240] sm:$0xf]
    %v244 = vld [vmem:[#allocation5 + $0x24c] sm:$0xf]
    %v245 = vlaneseq
    %v246 = vshrl.u32 %v245, 7
    %v247 = vsub.s32 3, %v246
    %v248 = vrot.slane %v54, %v247
    %v265 = vunpack.c.l.b16 %v229
    %v266 = vunpack.c.l.b16 %v230
    %v267 = vunpack.c.l.b16 %v231
    %v268 = vunpack.c.l.b16 %v232
    %v269 = vunpack.c.l.b16 %v233
    %v270 = vunpack.c.l.b16 %v234
    %v271 = vunpack.c.l.b16 %v235
    %v272 = vunpack.c.l.b16 %v236
    %v273 = vunpack.c.l.b16 %v237
    %v274 = vunpack.c.l.b16 %v238
    %v275 = vunpack.c.l.b16 %v239
    %v276 = vunpack.c.l.b16 %v240
    %v277 = vunpack.c.l.b16 %v241
    %v278 = vunpack.c.l.b16 %v242
    %v279 = vunpack.c.l.b16 %v243
    %v280 = vunpack.c.l.b16 %v244
    %v281 = vpack.c.b16 %v266, %v265
    %v282 = vpack.c.b16 %v268, %v267
    %v283 = vpack.c.b16 %v270, %v269
    %v284 = vpack.c.b16 %v272, %v271
    %v285 = vpack.c.b16 %v274, %v273
    %v286 = vpack.c.b16 %v276, %v275
    %v287 = vpack.c.b16 %v278, %v277
    %v288 = vpack.c.b16 %v280, %v279
    %297 = vmatprep.subr.bf16.mxu0 0
    %298 = vmatpush1.bf16.msra.mxu0 %v281
    %299 = vmatprep.subr.bf16.mxu0 0
    %300 = vmatpush1.bf16.msra.mxu0 %v282
    %301 = vmatprep.subr.bf16.mxu0 0
    %302 = vmatpush1.bf16.msra.mxu0 %v283
    %303 = vmatprep.subr.bf16.mxu0 0
    %304 = vmatpush1.bf16.msra.mxu0 %v284
    %305 = vmatprep.subr.bf16.mxu0 0
    %306 = vmatpush1.bf16.msra.mxu0 %v285
    %307 = vmatprep.subr.bf16.mxu0 0
    %308 = vmatpush1.bf16.msra.mxu0 %v286
    %309 = vmatprep.subr.bf16.mxu0 0
    %310 = vmatpush1.bf16.msra.mxu0 %v287
    %311 = vmatprep.subr.bf16.mxu0 0
    %312 = vmatpush1.bf16.msra.mxu0 %v288
    %313 = vmatprep.subr.bf16.mxu0 0
    %314 = vmatpush1.bf16.msra.mxu0 0
    %315 = vmatprep.subr.bf16.mxu0 0
    %316 = vmatpush1.bf16.msra.mxu0 0
    %317 = vmatprep.subr.bf16.mxu0 0
    %318 = vmatpush1.bf16.msra.mxu0 0
    %319 = vmatprep.subr.bf16.mxu0 0
    %320 = vmatpush1.bf16.msra.mxu0 0
    %321 = vmatprep.subr.bf16.mxu0 0
    %322 = vmatpush1.bf16.msra.mxu0 0
    %323 = vmatprep.subr.bf16.mxu0 0
    %324 = vmatpush1.bf16.msra.mxu0 0
    %325 = vmatprep.subr.bf16.mxu0 0
    %326 = vmatpush1.bf16.msra.mxu0 0
    %327 = vmatprep.subr.bf16.mxu0 0
    %328 = vmatpush1.bf16.msra.mxu0 0
    %329 = vmatprep.mubr.bf16.mxu0 0
    %330 = vmatmul.mubr.bf16.gmra.mrb[0].mxu0 %v228
    %v331 = vpop.f32.mrb[0].mxu0
    %v332 = vadd.f32 %v248, %v331
    %v333 = vpop.f32.mrb[0].mxu0
    %v334 = vpop.f32.mrb[0].mxu0
    %v335 = vpop.f32.mrb[0].mxu0
    %336 = vdwg.mxu0
    %v337 = vld [vmem:[#allocation5 + $0xd8] sm:$0xf]
    %v338 = vld [vmem:[#allocation5 + $0xe4] sm:$0xf]
    %v339 = vld [vmem:[#allocation5 + $0xf0] sm:$0xf]
    %v340 = vld [vmem:[#allocation5 + $0xfc] sm:$0xf]
    %v341 = vld [vmem:[#allocation5 + $0x108] sm:$0xf]
    %v342 = vld [vmem:[#allocation5 + $0x114] sm:$0xf]
    %v343 = vld [vmem:[#allocation5 + $0x120] sm:$0xf]
    %v344 = vld [vmem:[#allocation5 + $0x12c] sm:$0xf]
    %v345 = vld [vmem:[#allocation5 + $0x138] sm:$0xf]
    %v346 = vld [vmem:[#allocation5 + $0x144] sm:$0xf]
    %v347 = vld [vmem:[#allocation5 + $0x150] sm:$0xf]
    %v348 = vld [vmem:[#allocation5 + $0x15c] sm:$0xf]
    %v349 = vld [vmem:[#allocation5 + $0x168] sm:$0xf]
    %v350 = vld [vmem:[#allocation5 + $0x174] sm:$0xf]
    %v351 = vld [vmem:[#allocation5 + $0x180] sm:$0xf]
    %v352 = vld [vmem:[#allocation5 + $0x18c] sm:$0xf]
    %v353 = vlaneseq
    %v354 = vshrl.u32 %v353, 7
    %v355 = vsub.s32 2, %v354
    %v356 = vrot.slane %v54, %v355
    %v373 = vunpack.c.l.b16 %v337
    %v374 = vunpack.c.l.b16 %v338
    %v375 = vunpack.c.l.b16 %v339
    %v376 = vunpack.c.l.b16 %v340
    %v377 = vunpack.c.l.b16 %v341
    %v378 = vunpack.c.l.b16 %v342
    %v379 = vunpack.c.l.b16 %v343
    %v380 = vunpack.c.l.b16 %v344
    %v381 = vunpack.c.l.b16 %v345
    %v382 = vunpack.c.l.b16 %v346
    %v383 = vunpack.c.l.b16 %v347
    %v384 = vunpack.c.l.b16 %v348
    %v385 = vunpack.c.l.b16 %v349
    %v386 = vunpack.c.l.b16 %v350
    %v387 = vunpack.c.l.b16 %v351
    %v388 = vunpack.c.l.b16 %v352
    %v389 = vpack.c.b16 %v374, %v373
    %v390 = vpack.c.b16 %v376, %v375
    %v391 = vpack.c.b16 %v378, %v377
    %v392 = vpack.c.b16 %v380, %v379
    %v393 = vpack.c.b16 %v382, %v381
    %v394 = vpack.c.b16 %v384, %v383
    %v395 = vpack.c.b16 %v386, %v385
    %v396 = vpack.c.b16 %v388, %v387
    %405 = vmatprep.subr.bf16.mxu0 0
    %406 = vmatpush1.bf16.msra.mxu0 %v389
    %407 = vmatprep.subr.bf16.mxu0 0
    %408 = vmatpush1.bf16.msra.mxu0 %v390
    %409 = vmatprep.subr.bf16.mxu0 0
    %410 = vmatpush1.bf16.msra.mxu0 %v391
    %411 = vmatprep.subr.bf16.mxu0 0
    %412 = vmatpush1.bf16.msra.mxu0 %v392
    %413 = vmatprep.subr.bf16.mxu0 0
    %414 = vmatpush1.bf16.msra.mxu0 %v393
    %415 = vmatprep.subr.bf16.mxu0 0
    %416 = vmatpush1.bf16.msra.mxu0 %v394
    %417 = vmatprep.subr.bf16.mxu0 0
    %418 = vmatpush1.bf16.msra.mxu0 %v395
    %419 = vmatprep.subr.bf16.mxu0 0
    %420 = vmatpush1.bf16.msra.mxu0 %v396
    %421 = vmatprep.subr.bf16.mxu0 0
    %422 = vmatpush1.bf16.msra.mxu0 0
    %423 = vmatprep.subr.bf16.mxu0 0
    %424 = vmatpush1.bf16.msra.mxu0 0
    %425 = vmatprep.subr.bf16.mxu0 0
    %426 = vmatpush1.bf16.msra.mxu0 0
    %427 = vmatprep.subr.bf16.mxu0 0
    %428 = vmatpush1.bf16.msra.mxu0 0
    %429 = vmatprep.subr.bf16.mxu0 0
    %430 = vmatpush1.bf16.msra.mxu0 0
    %431 = vmatprep.subr.bf16.mxu0 0
    %432 = vmatpush1.bf16.msra.mxu0 0
    %433 = vmatprep.subr.bf16.mxu0 0
    %434 = vmatpush1.bf16.msra.mxu0 0
    %435 = vmatprep.subr.bf16.mxu0 0
    %436 = vmatpush1.bf16.msra.mxu0 0
    %437 = vmatprep.mubr.bf16.mxu0 0
    %438 = vmatmul.mubr.bf16.gmra.mrb[0].mxu0 %v228
    %v439 = vpop.f32.mrb[0].mxu0
    %v440 = vadd.f32 %v356, %v439
    %v441 = vpop.f32.mrb[0].mxu0
    %v442 = vpop.f32.mrb[0].mxu0
    %v443 = vpop.f32.mrb[0].mxu0
    %444 = vdwg.mxu0
    %v445 = vmul.f32 %v440, 0.1
    %v446 = vmax.f32 %v440, %v445
    %v447 = vadd.f32 %v446, %v332
    %v448 = vpack.c.bf16 %v447, %v447
    %v449 = vld [vmem:[#allocation5 + $0x258] sm:$0xff]
    %v450 = vld [vmem:[#allocation5 + $0x260] sm:$0xf]
    %v451 = vld [vmem:[#allocation5 + $0x264] sm:$0xff]
    %v452 = vld [vmem:[#allocation5 + $0x26c] sm:$0xf]
    %v453 = vld [vmem:[#allocation5 + $0x270] sm:$0xff]
    %v454 = vld [vmem:[#allocation5 + $0x278] sm:$0xf]
    %v455 = vld [vmem:[#allocation5 + $0x27c] sm:$0xff]
    %v456 = vld [vmem:[#allocation5 + $0x284] sm:$0xf]
    %v457 = vld [vmem:[#allocation5 + $0x288] sm:$0xff]
    %v458 = vld [vmem:[#allocation5 + $0x290] sm:$0xf]
    %v459 = vld [vmem:[#allocation5 + $0x294] sm:$0xff]
    %v460 = vld [vmem:[#allocation5 + $0x29c] sm:$0xf]
    %v461 = vld [vmem:[#allocation5 + $0x2a0] sm:$0xff]
    %v462 = vld [vmem:[#allocation5 + $0x2a8] sm:$0xf]
    %v463 = vld [vmem:[#allocation5 + $0x2ac] sm:$0xff]
    %v464 = vld [vmem:[#allocation5 + $0x2b4] sm:$0xf]
    %v465 = vld [vmem:[#allocation5 + $0x2b8] sm:$0xff]
    %v466 = vld [vmem:[#allocation5 + $0x2c0] sm:$0xf]
    %v467 = vld [vmem:[#allocation5 + $0x2c4] sm:$0xff]
    %v468 = vld [vmem:[#allocation5 + $0x2cc] sm:$0xf]
    %v469 = vld [vmem:[#allocation5 + $0x2d0] sm:$0xff]
    %v470 = vld [vmem:[#allocation5 + $0x2d8] sm:$0xf]
    %v471 = vld [vmem:[#allocation5 + $0x2dc] sm:$0xff]
    %v472 = vld [vmem:[#allocation5 + $0x2e4] sm:$0xf]
    %v473 = vld [vmem:[#allocation5 + $0x2e8] sm:$0xff]
    %v474 = vld [vmem:[#allocation5 + $0x2f0] sm:$0xf]
    %v475 = vld [vmem:[#allocation5 + $0x2f4] sm:$0xff]
    %v476 = vld [vmem:[#allocation5 + $0x2fc] sm:$0xf]
    %v477 = vld [vmem:[#allocation5 + $0x300] sm:$0xff]
    %v478 = vld [vmem:[#allocation5 + $0x308] sm:$0xf]
    %v479 = vld [vmem:[#allocation5 + $0x30c] sm:$0xff]
    %v480 = vld [vmem:[#allocation5 + $0x314] sm:$0xf]
    %v481 = vlaneseq
    %v482 = vshrl.u32 %v481, 7
    %v483 = vsub.s32 4, %v482
    %v484 = vrot.slane %v54, %v483
    %v485 = vlaneseq
    %v486 = vshrl.u32 %v485, 7
    %v487 = vsub.s32 4, %v486
    %v488 = vrot.slane %v55, %v487
    %v489 = vlaneseq
    %v490 = vshrl.u32 %v489, 7
    %v491 = vsub.s32 4, %v490
    %v492 = vrot.slane %v56, %v491
    %v525 = vunpack.c.l.b16 %v449
    %v526 = vunpack.c.h.b16 %v449
    %v527 = vunpack.c.l.b16 %v450
    %v528 = vunpack.c.l.b16 %v451
    %v529 = vunpack.c.h.b16 %v451
    %v530 = vunpack.c.l.b16 %v452
    %v531 = vunpack.c.l.b16 %v453
    %v532 = vunpack.c.h.b16 %v453
    %v533 = vunpack.c.l.b16 %v454
    %v534 = vunpack.c.l.b16 %v455
    %v535 = vunpack.c.h.b16 %v455
    %v536 = vunpack.c.l.b16 %v456
    %v537 = vunpack.c.l.b16 %v457
    %v538 = vunpack.c.h.b16 %v457
    %v539 = vunpack.c.l.b16 %v458
    %v540 = vunpack.c.l.b16 %v459
    %v541 = vunpack.c.h.b16 %v459
    %v542 = vunpack.c.l.b16 %v460
    %v543 = vunpack.c.l.b16 %v461
    %v544 = vunpack.c.h.b16 %v461
    %v545 = vunpack.c.l.b16 %v462
    %v546 = vunpack.c.l.b16 %v463
    %v547 = vunpack.c.h.b16 %v463
    %v548 = vunpack.c.l.b16 %v464
    %v549 = vunpack.c.l.b16 %v465
    %v550 = vunpack.c.h.b16 %v465
    %v551 = vunpack.c.l.b16 %v466
    %v552 = vunpack.c.l.b16 %v467
    %v553 = vunpack.c.h.b16 %v467
    %v554 = vunpack.c.l.b16 %v468
    %v555 = vunpack.c.l.b16 %v469
    %v556 = vunpack.c.h.b16 %v469
    %v557 = vunpack.c.l.b16 %v470
    %v558 = vunpack.c.l.b16 %v471
    %v559 = vunpack.c.h.b16 %v471
    %v560 = vunpack.c.l.b16 %v472
    %v561 = vunpack.c.l.b16 %v473
    %v562 = vunpack.c.h.b16 %v473
    %v563 = vunpack.c.l.b16 %v474
    %v564 = vunpack.c.l.b16 %v475
    %v565 = vunpack.c.h.b16 %v475
    %v566 = vunpack.c.l.b16 %v476
    %v567 = vunpack.c.l.b16 %v477
    %v568 = vunpack.c.h.b16 %v477
    %v569 = vunpack.c.l.b16 %v478
    %v570 = vunpack.c.l.b16 %v479
    %v571 = vunpack.c.h.b16 %v479
    %v572 = vunpack.c.l.b16 %v480
    %v573 = vpack.c.b16 %v528, %v525
    %v574 = vpack.c.b16 %v529, %v526
    %v575 = vpack.c.b16 %v530, %v527
    %v576 = vpack.c.b16 %v534, %v531
    %v577 = vpack.c.b16 %v535, %v532
    %v578 = vpack.c.b16 %v536, %v533
    %v579 = vpack.c.b16 %v540, %v537
    %v580 = vpack.c.b16 %v541, %v538
    %v581 = vpack.c.b16 %v542, %v539
    %v582 = vpack.c.b16 %v546, %v543
    %v583 = vpack.c.b16 %v547, %v544
    %v584 = vpack.c.b16 %v548, %v545
    %v585 = vpack.c.b16 %v552, %v549
    %v586 = vpack.c.b16 %v553, %v550
    %v587 = vpack.c.b16 %v554, %v551
    %v588 = vpack.c.b16 %v558, %v555
    %v589 = vpack.c.b16 %v559, %v556
    %v590 = vpack.c.b16 %v560, %v557
    %v591 = vpack.c.b16 %v564, %v561
    %v592 = vpack.c.b16 %v565, %v562
    %v593 = vpack.c.b16 %v566, %v563
    %v594 = vpack.c.b16 %v570, %v567
    %v595 = vpack.c.b16 %v571, %v568
    %v596 = vpack.c.b16 %v572, %v569
    %621 = vmatprep.subr.bf16.mxu0 %v574
    %622 = vmatpush1.bf16.msra.mxu0 %v573
    %623 = vmatprep.subr.bf16.mxu0 %v577
    %624 = vmatpush1.bf16.msra.mxu0 %v576
    %625 = vmatprep.subr.bf16.mxu0 %v580
    %626 = vmatpush1.bf16.msra.mxu0 %v579
    %627 = vmatprep.subr.bf16.mxu0 %v583
    %628 = vmatpush1.bf16.msra.mxu0 %v582
    %629 = vmatprep.subr.bf16.mxu0 %v586
    %630 = vmatpush1.bf16.msra.mxu0 %v585
    %631 = vmatprep.subr.bf16.mxu0 %v589
    %632 = vmatpush1.bf16.msra.mxu0 %v588
    %633 = vmatprep.subr.bf16.mxu0 %v592
    %634 = vmatpush1.bf16.msra.mxu0 %v591
    %635 = vmatprep.subr.bf16.mxu0 %v595
    %636 = vmatpush1.bf16.msra.mxu0 %v594
    %637 = vmatprep.subr.bf16.mxu0 0
    %638 = vmatpush1.bf16.msra.mxu0 0
    %639 = vmatprep.subr.bf16.mxu0 0
    %640 = vmatpush1.bf16.msra.mxu0 0
    %641 = vmatprep.subr.bf16.mxu0 0
    %642 = vmatpush1.bf16.msra.mxu0 0
    %643 = vmatprep.subr.bf16.mxu0 0
    %644 = vmatpush1.bf16.msra.mxu0 0
    %645 = vmatprep.subr.bf16.mxu0 0
    %646 = vmatpush1.bf16.msra.mxu0 0
    %647 = vmatprep.subr.bf16.mxu0 0
    %648 = vmatpush1.bf16.msra.mxu0 0
    %649 = vmatprep.subr.bf16.mxu0 0
    %650 = vmatpush1.bf16.msra.mxu0 0
    %651 = vmatprep.subr.bf16.mxu0 0
    %652 = vmatpush1.bf16.msra.mxu0 0
    %653 = vmatprep.mubr.bf16.mxu0 0
    %654 = vmatmul.mubr.bf16.gmra.mrb[0].mxu0 %v448
    %v655 = vpop.f32.mrb[0].mxu0
    %v656 = vadd.f32 %v484, %v655
    %v657 = vpop.f32.mrb[0].mxu0
    %v658 = vadd.f32 %v488, %v657
    %v659 = vpop.f32.mrb[0].mxu0
    %v660 = vpop.f32.mrb[0].mxu0
    %661 = vdwg.mxu0
    %662 = vmatprep.subr.bf16.mxu0 0
    %663 = vmatpush1.bf16.msra.mxu0 %v575
    %664 = vmatprep.subr.bf16.mxu0 0
    %665 = vmatpush1.bf16.msra.mxu0 %v578
    %666 = vmatprep.subr.bf16.mxu0 0
    %667 = vmatpush1.bf16.msra.mxu0 %v581
    %668 = vmatprep.subr.bf16.mxu0 0
    %669 = vmatpush1.bf16.msra.mxu0 %v584
    %670 = vmatprep.subr.bf16.mxu0 0
    %671 = vmatpush1.bf16.msra.mxu0 %v587
    %672 = vmatprep.subr.bf16.mxu0 0
    %673 = vmatpush1.bf16.msra.mxu0 %v590
    %674 = vmatprep.subr.bf16.mxu0 0
    %675 = vmatpush1.bf16.msra.mxu0 %v593
    %676 = vmatprep.subr.bf16.mxu0 0
    %677 = vmatpush1.bf16.msra.mxu0 %v596
    %678 = vmatprep.subr.bf16.mxu0 0
    %679 = vmatpush1.bf16.msra.mxu0 0
    %680 = vmatprep.subr.bf16.mxu0 0
    %681 = vmatpush1.bf16.msra.mxu0 0
    %682 = vmatprep.subr.bf16.mxu0 0
    %683 = vmatpush1.bf16.msra.mxu0 0
    %684 = vmatprep.subr.bf16.mxu0 0
    %685 = vmatpush1.bf16.msra.mxu0 0
    %686 = vmatprep.subr.bf16.mxu0 0
    %687 = vmatpush1.bf16.msra.mxu0 0
    %688 = vmatprep.subr.bf16.mxu0 0
    %689 = vmatpush1.bf16.msra.mxu0 0
    %690 = vmatprep.subr.bf16.mxu0 0
    %691 = vmatpush1.bf16.msra.mxu0 0
    %692 = vmatprep.subr.bf16.mxu0 0
    %693 = vmatpush1.bf16.msra.mxu0 0
    %694 = vmatprep.mubr.bf16.mxu0 0
    %695 = vmatmul.mubr.bf16.gmra.mrb[0].mxu0 %v448
    %v696 = vpop.f32.mrb[0].mxu0
    %v697 = vadd.f32 %v492, %v696
    %v698 = vpop.f32.mrb[0].mxu0
    %v699 = vpop.f32.mrb[0].mxu0
    %v700 = vpop.f32.mrb[0].mxu0
    %701 = vdwg.mxu0
    %v702 = vmul.f32 %v656, 0.1
    %v703 = vmul.f32 %v658, 0.1
    %v704 = vmul.f32 %v697, 0.1
    %v705 = vmax.f32 %v656, %v702
    %v706 = vmax.f32 %v658, %v703
    %v707 = vmax.f32 %v697, %v704
    %v708 = vpack.c.bf16 %v705, %v705
    %v709 = vpack.c.bf16 %v706, %v706
    %v710 = vld [vmem:[#allocation5 + $0x318] sm:$0xf]
    %v711 = vld [vmem:[#allocation5 + $0x324] sm:$0xf]
    %v712 = vld [vmem:[#allocation5 + $0x330] sm:$0xf]
    %v713 = vld [vmem:[#allocation5 + $0x33c] sm:$0xf]
    %v714 = vld [vmem:[#allocation5 + $0x348] sm:$0xf]
    %v715 = vld [vmem:[#allocation5 + $0x354] sm:$0xf]
    %v716 = vld [vmem:[#allocation5 + $0x360] sm:$0xf]
    %v717 = vld [vmem:[#allocation5 + $0x36c] sm:$0xf]
    %v718 = vld [vmem:[#allocation5 + $0x378] sm:$0xf]
    %v719 = vld [vmem:[#allocation5 + $0x384] sm:$0xf]
    %v720 = vld [vmem:[#allocation5 + $0x390] sm:$0xf]
    %v721 = vld [vmem:[#allocation5 + $0x39c] sm:$0xf]
    %v722 = vld [vmem:[#allocation5 + $0x3a8] sm:$0xf]
    %v723 = vld [vmem:[#allocation5 + $0x3b4] sm:$0xf]
    %v724 = vld [vmem:[#allocation5 + $0x3c0] sm:$0xf]
    %v725 = vld [vmem:[#allocation5 + $0x3cc] sm:$0xf]
    %v726 = vld [vmem:[#allocation5 + $0x3d8] sm:$0xf]
    %v727 = vld [vmem:[#allocation5 + $0x3e4] sm:$0xf]
    %v728 = vld [vmem:[#allocation5 + $0x3f0] sm:$0xf]
    %v729 = vld [vmem:[#allocation5 + $0x3fc] sm:$0xf]
    %v730 = vld [vmem:[#allocation5 + $0x408] sm:$0xf]
    %v731 = vld [vmem:[#allocation5 + $0x414] sm:$0xf]
    %v732 = vld [vmem:[#allocation5 + $0x420] sm:$0xf]
    %v733 = vld [vmem:[#allocation5 + $0x42c] sm:$0xf]
    %v734 = vld [vmem:[#allocation5 + $0x438] sm:$0xf]
    %v735 = vld [vmem:[#allocation5 + $0x444] sm:$0xf]
    %v736 = vld [vmem:[#allocation5 + $0x450] sm:$0xf]
    %v737 = vld [vmem:[#allocation5 + $0x45c] sm:$0xf]
    %v738 = vld [vmem:[#allocation5 + $0x468] sm:$0xf]
    %v739 = vld [vmem:[#allocation5 + $0x474] sm:$0xf]
    %v740 = vld [vmem:[#allocation5 + $0x480] sm:$0xf]
    %v741 = vld [vmem:[#allocation5 + $0x48c] sm:$0xf]
    %v742 = vlaneseq
    %v743 = vshrl.u32 %v742, 7
    %v744 = vsub.s32 5, %v743
    %v745 = vrot.slane %v54, %v744
    %v778 = vunpack.c.l.b16 %v710
    %v779 = vunpack.c.l.b16 %v711
    %v780 = vunpack.c.l.b16 %v712
    %v781 = vunpack.c.l.b16 %v713
    %v782 = vunpack.c.l.b16 %v714
    %v783 = vunpack.c.l.b16 %v715
    %v784 = vunpack.c.l.b16 %v716
    %v785 = vunpack.c.l.b16 %v717
    %v786 = vunpack.c.l.b16 %v718
    %v787 = vunpack.c.l.b16 %v719
    %v788 = vunpack.c.l.b16 %v720
    %v789 = vunpack.c.l.b16 %v721
    %v790 = vunpack.c.l.b16 %v722
    %v791 = vunpack.c.l.b16 %v723
    %v792 = vunpack.c.l.b16 %v724
    %v793 = vunpack.c.l.b16 %v725
    %v794 = vunpack.c.l.b16 %v726
    %v795 = vunpack.c.l.b16 %v727
    %v796 = vunpack.c.l.b16 %v728
    %v797 = vunpack.c.l.b16 %v729
    %v798 = vunpack.c.l.b16 %v730
    %v799 = vunpack.c.l.b16 %v731
    %v800 = vunpack.c.l.b16 %v732
    %v801 = vunpack.c.l.b16 %v733
    %v802 = vunpack.c.l.b16 %v734
    %v803 = vunpack.c.l.b16 %v735
    %v804 = vunpack.c.l.b16 %v736
    %v805 = vunpack.c.l.b16 %v737
    %v806 = vunpack.c.l.b16 %v738
    %v807 = vunpack.c.l.b16 %v739
    %v808 = vunpack.c.l.b16 %v740
    %v809 = vunpack.c.l.b16 %v741
    %v810 = vpack.c.b16 %v779, %v778
    %v811 = vpack.c.b16 %v781, %v780
    %v812 = vpack.c.b16 %v783, %v782
    %v813 = vpack.c.b16 %v785, %v784
    %v814 = vpack.c.b16 %v787, %v786
    %v815 = vpack.c.b16 %v789, %v788
    %v816 = vpack.c.b16 %v791, %v790
    %v817 = vpack.c.b16 %v793, %v792
    %v818 = vpack.c.b16 %v795, %v794
    %v819 = vpack.c.b16 %v797, %v796
    %v820 = vpack.c.b16 %v799, %v798
    %v821 = vpack.c.b16 %v801, %v800
    %v822 = vpack.c.b16 %v803, %v802
    %v823 = vpack.c.b16 %v805, %v804
    %v824 = vpack.c.b16 %v807, %v806
    %v825 = vpack.c.b16 %v809, %v808
    %842 = vmatprep.subr.bf16.mxu0 0
    %843 = vmatpush1.bf16.msra.mxu0 %v810
    %844 = vmatprep.subr.bf16.mxu0 0
    %845 = vmatpush1.bf16.msra.mxu0 %v811
    %846 = vmatprep.subr.bf16.mxu0 0
    %847 = vmatpush1.bf16.msra.mxu0 %v812
    %848 = vmatprep.subr.bf16.mxu0 0
    %849 = vmatpush1.bf16.msra.mxu0 %v813
    %850 = vmatprep.subr.bf16.mxu0 0
    %851 = vmatpush1.bf16.msra.mxu0 %v814
    %852 = vmatprep.subr.bf16.mxu0 0
    %853 = vmatpush1.bf16.msra.mxu0 %v815
    %854 = vmatprep.subr.bf16.mxu0 0
    %855 = vmatpush1.bf16.msra.mxu0 %v816
    %856 = vmatprep.subr.bf16.mxu0 0
    %857 = vmatpush1.bf16.msra.mxu0 %v817
    %858 = vmatprep.subr.bf16.mxu0 0
    %859 = vmatpush1.bf16.msra.mxu0 %v818
    %860 = vmatprep.subr.bf16.mxu0 0
    %861 = vmatpush1.bf16.msra.mxu0 %v819
    %862 = vmatprep.subr.bf16.mxu0 0
    %863 = vmatpush1.bf16.msra.mxu0 %v820
    %864 = vmatprep.subr.bf16.mxu0 0
    %865 = vmatpush1.bf16.msra.mxu0 %v821
    %866 = vmatprep.subr.bf16.mxu0 0
    %867 = vmatpush1.bf16.msra.mxu0 %v822
    %868 = vmatprep.subr.bf16.mxu0 0
    %869 = vmatpush1.bf16.msra.mxu0 %v823
    %870 = vmatprep.subr.bf16.mxu0 0
    %871 = vmatpush1.bf16.msra.mxu0 %v824
    %872 = vmatprep.subr.bf16.mxu0 0
    %873 = vmatpush1.bf16.msra.mxu0 %v825
    %874 = vmatprep.mubr.bf16.mxu0 %v709
    %875 = vmatmul.mubr.bf16.gmra.mrb[0].mxu0 %v708
    %v876 = vpop.f32.mrb[0].mxu0
    %v877 = vadd.f32 %v745, %v876
    %v878 = vpop.f32.mrb[0].mxu0
    %v879 = vpop.f32.mrb[0].mxu0
    %v880 = vpop.f32.mrb[0].mxu0
    %881 = vdwg.mxu0
    %v882 = vmul.f32 %v877, 0.1
    %v883 = vmax.f32 %v877, %v882
    %v884 = vpack.c.bf16 %v883, %v883
    %v885 = vpack.c.bf16 %v707, %v707
    %v886 = vld [vmem:[#allocation5 + $0x498] sm:$0xf]
    %v887 = vld [vmem:[#allocation5 + $0x4a4] sm:$0xf]
    %v888 = vld [vmem:[#allocation5 + $0x4b0] sm:$0xf]
    %v889 = vld [vmem:[#allocation5 + $0x4bc] sm:$0xf]
    %v890 = vld [vmem:[#allocation5 + $0x4c8] sm:$0xf]
    %v891 = vld [vmem:[#allocation5 + $0x4d4] sm:$0xf]
    %v892 = vld [vmem:[#allocation5 + $0x4e0] sm:$0xf]
    %v893 = vld [vmem:[#allocation5 + $0x4ec] sm:$0xf]
    %v894 = vld [vmem:[#allocation5 + $0x4f8] sm:$0xf]
    %v895 = vld [vmem:[#allocation5 + $0x504] sm:$0xf]
    %v896 = vld [vmem:[#allocation5 + $0x510] sm:$0xf]
    %v897 = vld [vmem:[#allocation5 + $0x51c] sm:$0xf]
    %v898 = vld [vmem:[#allocation5 + $0x528] sm:$0xf]
    %v899 = vld [vmem:[#allocation5 + $0x534] sm:$0xf]
    %v900 = vld [vmem:[#allocation5 + $0x540] sm:$0xf]
    %v901 = vld [vmem:[#allocation5 + $0x54c] sm:$0xf]
    %v902 = vld [vmem:[#allocation5 + $0x558] sm:$0xf]
    %v903 = vld [vmem:[#allocation5 + $0x564] sm:$0xf]
    %v904 = vld [vmem:[#allocation5 + $0x570] sm:$0xf]
    %v905 = vld [vmem:[#allocation5 + $0x57c] sm:$0xf]
    %v906 = vld [vmem:[#allocation5 + $0x588] sm:$0xf]
    %v907 = vld [vmem:[#allocation5 + $0x594] sm:$0xf]
    %v908 = vld [vmem:[#allocation5 + $0x5a0] sm:$0xf]
    %v909 = vld [vmem:[#allocation5 + $0x5ac] sm:$0xf]
    %v910 = vld [vmem:[#allocation5 + $0x5b8] sm:$0xf]
    %v911 = vld [vmem:[#allocation5 + $0x5c4] sm:$0xf]
    %v912 = vld [vmem:[#allocation5 + $0x5d0] sm:$0xf]
    %v913 = vld [vmem:[#allocation5 + $0x5dc] sm:$0xf]
    %v914 = vld [vmem:[#allocation5 + $0x5e8] sm:$0xf]
    %v915 = vld [vmem:[#allocation5 + $0x5f4] sm:$0xf]
    %v916 = vld [vmem:[#allocation5 + $0x600] sm:$0xf]
    %v917 = vld [vmem:[#allocation5 + $0x60c] sm:$0xf]
    %v918 = vlaneseq
    %v919 = vshrl.u32 %v918, 7
    %v920 = vsub.s32 6, %v919
    %v921 = vrot.slane %v54, %v920
    %v954 = vunpack.c.l.b16 %v886
    %v955 = vunpack.c.l.b16 %v887
    %v956 = vunpack.c.l.b16 %v888
    %v957 = vunpack.c.l.b16 %v889
    %v958 = vunpack.c.l.b16 %v890
    %v959 = vunpack.c.l.b16 %v891
    %v960 = vunpack.c.l.b16 %v892
    %v961 = vunpack.c.l.b16 %v893
    %v962 = vunpack.c.l.b16 %v894
    %v963 = vunpack.c.l.b16 %v895
    %v964 = vunpack.c.l.b16 %v896
    %v965 = vunpack.c.l.b16 %v897
    %v966 = vunpack.c.l.b16 %v898
    %v967 = vunpack.c.l.b16 %v899
    %v968 = vunpack.c.l.b16 %v900
    %v969 = vunpack.c.l.b16 %v901
    %v970 = vunpack.c.l.b16 %v902
    %v971 = vunpack.c.l.b16 %v903
    %v972 = vunpack.c.l.b16 %v904
    %v973 = vunpack.c.l.b16 %v905
    %v974 = vunpack.c.l.b16 %v906
    %v975 = vunpack.c.l.b16 %v907
    %v976 = vunpack.c.l.b16 %v908
    %v977 = vunpack.c.l.b16 %v909
    %v978 = vunpack.c.l.b16 %v910
    %v979 = vunpack.c.l.b16 %v911
    %v980 = vunpack.c.l.b16 %v912
    %v981 = vunpack.c.l.b16 %v913
    %v982 = vunpack.c.l.b16 %v914
    %v983 = vunpack.c.l.b16 %v915
    %v984 = vunpack.c.l.b16 %v916
    %v985 = vunpack.c.l.b16 %v917
    %v986 = vpack.c.b16 %v955, %v954
    %v987 = vpack.c.b16 %v957, %v956
    %v988 = vpack.c.b16 %v959, %v958
    %v989 = vpack.c.b16 %v961, %v960
    %v990 = vpack.c.b16 %v963, %v962
    %v991 = vpack.c.b16 %v965, %v964
    %v992 = vpack.c.b16 %v967, %v966
    %v993 = vpack.c.b16 %v969, %v968
    %v994 = vpack.c.b16 %v971, %v970
    %v995 = vpack.c.b16 %v973, %v972
    %v996 = vpack.c.b16 %v975, %v974
    %v997 = vpack.c.b16 %v977, %v976
    %v998 = vpack.c.b16 %v979, %v978
    %v999 = vpack.c.b16 %v981, %v980
    %v1000 = vpack.c.b16 %v983, %v982
    %v1001 = vpack.c.b16 %v985, %v984
    %1018 = vmatprep.subr.bf16.mxu0 0
    %1019 = vmatpush1.bf16.msra.mxu0 %v986
    %1020 = vmatprep.subr.bf16.mxu0 0
    %1021 = vmatpush1.bf16.msra.mxu0 %v987
    %1022 = vmatprep.subr.bf16.mxu0 0
    %1023 = vmatpush1.bf16.msra.mxu0 %v988
    %1024 = vmatprep.subr.bf16.mxu0 0
    %1025 = vmatpush1.bf16.msra.mxu0 %v989
    %1026 = vmatprep.subr.bf16.mxu0 0
    %1027 = vmatpush1.bf16.msra.mxu0 %v990
    %1028 = vmatprep.subr.bf16.mxu0 0
    %1029 = vmatpush1.bf16.msra.mxu0 %v991
    %1030 = vmatprep.subr.bf16.mxu0 0
    %1031 = vmatpush1.bf16.msra.mxu0 %v992
    %1032 = vmatprep.subr.bf16.mxu0 0
    %1033 = vmatpush1.bf16.msra.mxu0 %v993
    %1034 = vmatprep.subr.bf16.mxu0 0
    %1035 = vmatpush1.bf16.msra.mxu0 %v994
    %1036 = vmatprep.subr.bf16.mxu0 0
    %1037 = vmatpush1.bf16.msra.mxu0 %v995
    %1038 = vmatprep.subr.bf16.mxu0 0
    %1039 = vmatpush1.bf16.msra.mxu0 %v996
    %1040 = vmatprep.subr.bf16.mxu0 0
    %1041 = vmatpush1.bf16.msra.mxu0 %v997
    %1042 = vmatprep.subr.bf16.mxu0 0
    %1043 = vmatpush1.bf16.msra.mxu0 %v998
    %1044 = vmatprep.subr.bf16.mxu0 0
    %1045 = vmatpush1.bf16.msra.mxu0 %v999
    %1046 = vmatprep.subr.bf16.mxu0 0
    %1047 = vmatpush1.bf16.msra.mxu0 %v1000
    %1048 = vmatprep.subr.bf16.mxu0 0
    %1049 = vmatpush1.bf16.msra.mxu0 %v1001
    %1050 = vmatprep.mubr.bf16.mxu0 %v885
    %1051 = vmatmul.mubr.bf16.gmra.mrb[0].mxu0 %v884
    %v1052 = vpop.f32.mrb[0].mxu0
    %v1053 = vadd.f32 %v921, %v1052
    %v1054 = vpop.f32.mrb[0].mxu0
    %v1055 = vpop.f32.mrb[0].mxu0
    %v1056 = vpop.f32.mrb[0].mxu0
    %1057 = vdwg.mxu0
    %v1058 = vmul.f32 %v1053, 0.1
    %v1059 = vmax.f32 %v1053, %v1058
    %v1060 = vpack.c.bf16 %v1059, %v1059
    %v1061 = vld [vmem:[#allocation5 + $0x618] sm:$0xf]
    %v1062 = vld [vmem:[#allocation5 + $0x624] sm:$0xf]
    %v1063 = vld [vmem:[#allocation5 + $0x630] sm:$0xf]
    %v1064 = vld [vmem:[#allocation5 + $0x63c] sm:$0xf]
    %v1065 = vld [vmem:[#allocation5 + $0x648] sm:$0xf]
    %v1066 = vld [vmem:[#allocation5 + $0x654] sm:$0xf]
    %v1067 = vld [vmem:[#allocation5 + $0x660] sm:$0xf]
    %v1068 = vld [vmem:[#allocation5 + $0x66c] sm:$0xf]
    %v1069 = vld [vmem:[#allocation5 + $0x678] sm:$0xf]
    %v1070 = vld [vmem:[#allocation5 + $0x684] sm:$0xf]
    %v1071 = vld [vmem:[#allocation5 + $0x690] sm:$0xf]
    %v1072 = vld [vmem:[#allocation5 + $0x69c] sm:$0xf]
    %v1073 = vld [vmem:[#allocation5 + $0x6a8] sm:$0xf]
    %v1074 = vld [vmem:[#allocation5 + $0x6b4] sm:$0xf]
    %v1075 = vld [vmem:[#allocation5 + $0x6c0] sm:$0xf]
    %v1076 = vld [vmem:[#allocation5 + $0x6cc] sm:$0xf]
    %v1077 = vlaneseq
    %v1078 = vshrl.u32 %v1077, 7
    %v1079 = vsub.s32 7, %v1078
    %v1080 = vrot.slane %v54, %v1079
    %v1097 = vunpack.c.l.b16 %v1061
    %v1098 = vunpack.c.l.b16 %v1062
    %v1099 = vunpack.c.l.b16 %v1063
    %v1100 = vunpack.c.l.b16 %v1064
    %v1101 = vunpack.c.l.b16 %v1065
    %v1102 = vunpack.c.l.b16 %v1066
    %v1103 = vunpack.c.l.b16 %v1067
    %v1104 = vunpack.c.l.b16 %v1068
    %v1105 = vunpack.c.l.b16 %v1069
    %v1106 = vunpack.c.l.b16 %v1070
    %v1107 = vunpack.c.l.b16 %v1071
    %v1108 = vunpack.c.l.b16 %v1072
    %v1109 = vunpack.c.l.b16 %v1073
    %v1110 = vunpack.c.l.b16 %v1074
    %v1111 = vunpack.c.l.b16 %v1075
    %v1112 = vunpack.c.l.b16 %v1076
    %v1113 = vpack.c.b16 %v1098, %v1097
    %v1114 = vpack.c.b16 %v1100, %v1099
    %v1115 = vpack.c.b16 %v1102, %v1101
    %v1116 = vpack.c.b16 %v1104, %v1103
    %v1117 = vpack.c.b16 %v1106, %v1105
    %v1118 = vpack.c.b16 %v1108, %v1107
    %v1119 = vpack.c.b16 %v1110, %v1109
    %v1120 = vpack.c.b16 %v1112, %v1111
    %1129 = vmatprep.subr.bf16.mxu0 0
    %1130 = vmatpush1.bf16.msra.mxu0 %v1113
    %1131 = vmatprep.subr.bf16.mxu0 0
    %1132 = vmatpush1.bf16.msra.mxu0 %v1114
    %1133 = vmatprep.subr.bf16.mxu0 0
    %1134 = vmatpush1.bf16.msra.mxu0 %v1115
    %1135 = vmatprep.subr.bf16.mxu0 0
    %1136 = vmatpush1.bf16.msra.mxu0 %v1116
    %1137 = vmatprep.subr.bf16.mxu0 0
    %1138 = vmatpush1.bf16.msra.mxu0 %v1117
    %1139 = vmatprep.subr.bf16.mxu0 0
    %1140 = vmatpush1.bf16.msra.mxu0 %v1118
    %1141 = vmatprep.subr.bf16.mxu0 0
    %1142 = vmatpush1.bf16.msra.mxu0 %v1119
    %1143 = vmatprep.subr.bf16.mxu0 0
    %1144 = vmatpush1.bf16.msra.mxu0 %v1120
    %1145 = vmatprep.subr.bf16.mxu0 0
    %1146 = vmatpush1.bf16.msra.mxu0 0
    %1147 = vmatprep.subr.bf16.mxu0 0
    %1148 = vmatpush1.bf16.msra.mxu0 0
    %1149 = vmatprep.subr.bf16.mxu0 0
    %1150 = vmatpush1.bf16.msra.mxu0 0
    %1151 = vmatprep.subr.bf16.mxu0 0
    %1152 = vmatpush1.bf16.msra.mxu0 0
    %1153 = vmatprep.subr.bf16.mxu0 0
    %1154 = vmatpush1.bf16.msra.mxu0 0
    %1155 = vmatprep.subr.bf16.mxu0 0
    %1156 = vmatpush1.bf16.msra.mxu0 0
    %1157 = vmatprep.subr.bf16.mxu0 0
    %1158 = vmatpush1.bf16.msra.mxu0 0
    %1159 = vmatprep.subr.bf16.mxu0 0
    %1160 = vmatpush1.bf16.msra.mxu0 0
    %1161 = vmatprep.mubr.bf16.mxu0 0
    %1162 = vmatmul.mubr.bf16.gmra.mrb[0].mxu0 %v1060
    %v1163 = vpop.f32.mrb[0].mxu0
    %v1164 = vadd.f32 %v1080, %v1163
    %v1165 = vpop.f32.mrb[0].mxu0
    %v1166 = vpop.f32.mrb[0].mxu0
    %v1167 = vpop.f32.mrb[0].mxu0
    %1168 = vdwg.mxu0
    %1169 = vst [vmem:[#allocation8] sm:$0xff] %v1164
    // Predicated region
    $region26: #{tpu_custom_call.1} parent=1 // pred_check
      _
    $region27: #{tpu_custom_call.1} parent=1 // pred_check_branch
      %1171 = sbr.rel (0) target = $region29
    $region28: #{tpu_custom_call.1} parent=1 // pred_region
      %s1173 = ssub.s32 128, 128
      %1174 = vsyncadd [#allocation4], %s1173
      %s1176 = sshll.u32 [#allocation8], 4
      %s1177 = int_to_ptr.vmem [resolvable:$true] %s1176
      %1179 = dma.vmem_to_hbm [thread:$0]  %s1177, 128, %s3, [#allocation4]
    $region29: #{tpu_custom_call.1} parent=1 // pred_fallthru
      _
    // Predicated region
    $region30: #{tpu_custom_call.1} parent=1 // pred_check
      _
    $region31: #{tpu_custom_call.1} parent=1 // pred_check_branch
      %1181 = sbr.rel (0) target = $region33
    $region32: #{tpu_custom_call.1} parent=1 // pred_region
      %1182 = dma.done [#allocation4], 128
    $region33: #{tpu_custom_call.1} parent=1 // pred_fallthru
      _
    %1183 = vsyncpa [#allocation3], 1
    %1184 = vsyncpa [#allocation6], 1
    %1185 = vsyncpa [#allocation4], 1

</llo_original>
